<compile_context>
chip_gen: v6e
topology: v6e:2x2x1
jax: 0.10.0
libtpu: 0.0.40
codegen_flags: <defaults>
</compile_context>

<pallas_src>
import functools

import jax
import jax.numpy as jnp
from jax.experimental import pallas as pl
from jax.experimental.pallas import tpu as pltpu


def _round_up(n, m):
    return ((n + m - 1) // m) * m


def _tpu_kind():
    try:
        return jax.devices()[0].device_kind.lower()
    except Exception:
        return ""


def _default_compute_dtype():
    # bf16 VPU/EUP paths exist on v6e (Trillium) and v7x; v4/v5e/v5p lack them, so bf16 there
    # only adds convert ops (review: skip bf16 on v5e).
    kind = _tpu_kind()
    if any(tag in kind for tag in ("v6", "v7", "trillium")):
        return jnp.bfloat16
    return jnp.float32


def _min_grid_steps():
    # v7x has 2 TensorCores/chip; with dimension_semantics=("parallel",) the batch grid axis is
    # sharded across them, so keep at least 2 grid steps or one core idles.
    return 2 if "v7" in _tpu_kind() else 1


def mlp_kernel(xt_ref, w1_ref, b1_ref, w2_ref, b2_ref, w3_ref, b3_ref, o_ref,
               *, compute_dtype):
    cd = compute_dtype
    xt = xt_ref[...].astype(cd)                        # (2, TB), batch on lanes
    w1 = w1_ref[...].astype(cd)                        # (128, 2)

    # fc1 + tanh: K=2 contraction as two VPU broadcast multiply-adds (no MXU).
    h1 = jnp.tanh(
        w1[:, 0:1] * xt[0:1, :]                        # (128,1)*(1,TB) -> (128,TB)
        + w1[:, 1:2] * xt[1:2, :]
        + b1_ref[...].astype(cd)                       # (128,1) broadcast over lanes
    )                                                  # (128, TB) in compute dtype

    # fc2 + tanh: the only MXU matmul (M=64, K=128, N=TB -> lanes fully used).
    # Operands in compute dtype (bf16 on v6e/v7x -> single-pass MXU), f32 accumulate.
    h2_lin = jnp.dot(w2_ref[...].astype(cd), h1,
                     preferred_element_type=jnp.float32)           # (64, TB) f32
    h2 = jnp.tanh((h2_lin + b2_ref[...]).astype(cd))               # (64, TB)

    # fc3 (N=1): VPU multiply + sublane (XLU) reduction, accumulated in f32; lane-dense result.
    y = jnp.sum((w3_ref[...].astype(cd) * h2).astype(jnp.float32),
                axis=0, keepdims=True) + b3_ref[0]                 # (1, TB) f32
    o_ref[...] = y.astype(o_ref.dtype)


def temperature_regressor(x, params, *, tb=8192, compute_dtype=None):
    """x: (B, 2) float32.  params: PyTorch-layout weights.  Returns (B, 1) float32.

    tb: batch tile (rows per grid step). 8192 is the sweet spot: ~6-8 MiB of per-step VMEM,
    well under every generation's scoped limit (we raise it to 48 MiB anyway), and per-step
    fixed overhead is amortized. The tile is clamped/rebalanced for small or ragged B, and on
    v7x it is additionally capped so the grid has >= 2 steps (one per TensorCore).

    compute_dtype: None -> auto (bf16 on v6e/v7x, f32 on v5e/others). Pass jnp.float32 to force
    the exact-precision path.
    """
    if compute_dtype is None:
        compute_dtype = _default_compute_dtype()

    B = x.shape[0]

    # Batch tile selection: clamp to what B needs, keep >= 2 steps on v7x, rebalance so the
    # padding of the last tile stays < 128 rows per tile on average.
    tb = max(128, min(int(tb), _round_up(pl.cdiv(B, _min_grid_steps()), 128)))
    nb = pl.cdiv(B, tb)
    tb = _round_up(pl.cdiv(B, nb), 128)
    nb = pl.cdiv(B, tb)
    B_pad = nb * tb

    # Layout plumbing: batch onto the lane axis (see header comment for why this stays in the
    # wrapper). Padding only materializes when B is ragged w.r.t. the tile.
    xt = x.T                                               # (2, B)
    if B_pad != B:
        xt = jnp.pad(xt, ((0, 0), (0, B_pad - B)))         # padded cols are harmless garbage

    resident = lambda shape: pl.BlockSpec(shape, lambda i: (0, 0))  # stays in VMEM

    out = pl.pallas_call(
        functools.partial(mlp_kernel, compute_dtype=compute_dtype),
        out_shape=jax.ShapeDtypeStruct((1, B_pad), jnp.float32),
        grid=(nb,),
        in_specs=[
            pl.BlockSpec((2, tb), lambda i: (0, i)),            # x tile (batch on lanes)
            resident((128, 2)),                                 # w1
            resident((128, 1)),                                 # b1
            resident((64, 128)),                                # w2
            resident((64, 1)),                                  # b2
            resident((64, 1)),                                  # w3 (column)
            pl.BlockSpec(memory_space=pltpu.MemorySpace.SMEM),  # b3 scalar
        ],
        out_specs=pl.BlockSpec((1, tb), lambda i: (0, i)),      # lane-dense output slab
        compiler_params=pltpu.CompilerParams(
            dimension_semantics=("parallel",),                  # megacore sharding on v7x
            vmem_limit_bytes=48 * 1024 * 1024,                  # big tiles safe on v5e's 16 MiB default
        ),
    )(xt, params["w1"], params["b1"], params["w2"], params["b2"],
      params["w3"], params["b3"])

    return out[0, :B, None]                                     # (B, 1), drop padding


def init_params(key):
    """Deterministic init mimicking PyTorch Linear default (uniform +-1/sqrt(fan_in)),
    stored in the layouts the kernel consumes (PyTorch (out,in) weights, column biases)."""
    def linear(key, fan_in, fan_out):
        kw, kb = jax.random.split(key)
        bound = 1.0 / jnp.sqrt(fan_in)
        w = jax.random.uniform(kw, (fan_out, fan_in), jnp.float32, -bound, bound)
        b = jax.random.uniform(kb, (fan_out,), jnp.float32, -bound, bound)
        return w, b

    k1, k2, k3 = jax.random.split(key, 3)
    w1, b1 = linear(k1, 2, 128)      # (128, 2), (128,)
    w2, b2 = linear(k2, 128, 64)     # (64, 128), (64,)
    w3, b3 = linear(k3, 64, 1)       # (1, 64), (1,)
    return {
        "w1": w1, "b1": b1[:, None],     # (128, 2), (128, 1)
        "w2": w2, "b2": b2[:, None],     # (64, 128), (64, 1)
        "w3": w3.T, "b3": b3,            # (64, 1),   (1,)
    }


def reference(x, p):
    """Pure-JAX reference matching PyTorch semantics (y = x @ W.T + b)."""
    h1 = jnp.tanh(x @ p["w1"].T + p["b1"][:, 0])
    h2 = jnp.tanh(h1 @ p["w2"].T + p["b2"][:, 0])
    return h2 @ p["w3"] + p["b3"]


if __name__ == "__main__":
    key = jax.random.PRNGKey(0)
    kx, kp = jax.random.split(key)

    B = 8  # small demo batch; real wins from the tiling appear at B in the thousands+
    x = jax.random.normal(kx, (B, 2), jnp.float32)
    params = init_params(kp)

    ref = reference(x, params)

    # Strict numerical check: force the pure-f32 path.
    out_f32 = jax.block_until_ready(
        temperature_regressor(x, params, compute_dtype=jnp.float32))
    assert out_f32.shape == (B, 1), out_f32.shape
    assert jnp.allclose(out_f32, ref, atol=1e-4, rtol=1e-4), (out_f32, ref)

    # Default (generation-gated) path: bf16 activations on v6e/v7x, f32 elsewhere.
    out = jax.block_until_ready(temperature_regressor(x, params))
    assert out.shape == (B, 1), out.shape
    assert jnp.allclose(out, ref, atol=5e-2, rtol=5e-2), (out, ref)

    print("KERNEL_OK")
</pallas_src>

<mosaic_0001>
module attributes {stable_mosaic.version = 11 : i64} {
  func.func @mlp_kernel(%arg0: i32, %arg1: memref<2x128xf32, #tpu.memory_space<vmem>>, %arg2: memref<128x2xf32, #tpu.memory_space<vmem>>, %arg3: memref<128x1xf32, #tpu.memory_space<vmem>>, %arg4: memref<64x128xf32, #tpu.memory_space<vmem>>, %arg5: memref<64x1xf32, #tpu.memory_space<vmem>>, %arg6: memref<64x1xf32, #tpu.memory_space<vmem>>, %arg7: memref<1xf32, #tpu.memory_space<smem>>, %arg8: memref<1x128xf32, #tpu.memory_space<vmem>>) attributes {dimension_semantics = [#tpu.dimension_semantics<parallel>], iteration_bounds = array<i64: 1>, scalar_prefetch = 0 : i64, scratch_operands = 0 : i64, tpu.core_type = #tpu.core_type<tc>, window_params = [{transform_indices = @transform_0, window_bounds = array<i64: 2, 128>}, {pipeline_mode = #tpu.pipeline_mode<synchronous>, transform_indices = @transform_1, window_bounds = array<i64: 128, 2>}, {pipeline_mode = #tpu.pipeline_mode<synchronous>, transform_indices = @transform_2, window_bounds = array<i64: 128, 1>}, {pipeline_mode = #tpu.pipeline_mode<synchronous>, transform_indices = @transform_3, window_bounds = array<i64: 64, 128>}, {pipeline_mode = #tpu.pipeline_mode<synchronous>, transform_indices = @transform_4, window_bounds = array<i64: 64, 1>}, {pipeline_mode = #tpu.pipeline_mode<synchronous>, transform_indices = @transform_5, window_bounds = array<i64: 64, 1>}, {transform_indices = @transform_6, window_bounds = array<i64: 1>}, {transform_indices = @transform_7, window_bounds = array<i64: 1, 128>}]} {
    %c0 = arith.constant 0 : index
    %c0_0 = arith.constant 0 : index
    %0 = vector.load %arg1[%c0, %c0_0] : memref<2x128xf32, #tpu.memory_space<vmem>>, vector<2x128xf32>
    %c0_1 = arith.constant 0 : index
    %c0_2 = arith.constant 0 : index
    %1 = vector.load %arg2[%c0_1, %c0_2] : memref<128x2xf32, #tpu.memory_space<vmem>>, vector<128x2xf32>
    %2 = vector.extract_strided_slice %1 {offsets = [0, 0], sizes = [128, 1], strides = [1, 1]} : vector<128x2xf32> to vector<128x1xf32>
    %3 = vector.extract_strided_slice %0 {offsets = [0, 0], sizes = [1, 128], strides = [1, 1]} : vector<2x128xf32> to vector<1x128xf32>
    %4 = vector.broadcast %2 : vector<128x1xf32> to vector<128x128xf32>
    %5 = vector.broadcast %3 : vector<1x128xf32> to vector<128x128xf32>
    %6 = arith.mulf %4, %5 : vector<128x128xf32>
    %7 = vector.extract_strided_slice %1 {offsets = [0, 1], sizes = [128, 1], strides = [1, 1]} : vector<128x2xf32> to vector<128x1xf32>
    %8 = vector.extract_strided_slice %0 {offsets = [1, 0], sizes = [1, 128], strides = [1, 1]} : vector<2x128xf32> to vector<1x128xf32>
    %9 = vector.broadcast %7 : vector<128x1xf32> to vector<128x128xf32>
    %10 = vector.broadcast %8 : vector<1x128xf32> to vector<128x128xf32>
    %11 = arith.mulf %9, %10 : vector<128x128xf32>
    %12 = arith.addf %6, %11 : vector<128x128xf32>
    %c0_3 = arith.constant 0 : index
    %c0_4 = arith.constant 0 : index
    %13 = vector.load %arg3[%c0_3, %c0_4] : memref<128x1xf32, #tpu.memory_space<vmem>>, vector<128x1xf32>
    %14 = vector.broadcast %13 : vector<128x1xf32> to vector<128x128xf32>
    %15 = arith.addf %12, %14 : vector<128x128xf32>
    %16 = math.tanh %15 : vector<128x128xf32>
    %c0_5 = arith.constant 0 : index
    %c0_6 = arith.constant 0 : index
    %17 = vector.load %arg4[%c0_5, %c0_6] : memref<64x128xf32, #tpu.memory_space<vmem>>, vector<64x128xf32>
    %cst = arith.constant dense<0.000000e+00> : vector<64x128xf32>
    %18 = tpu.matmul %17, %16, %cst {dimension_numbers = #tpu.dot_dimension_numbers<[1], [0], [0], [1], [0, 0, 1, 1], [], []>} : vector<64x128xf32>, vector<128x128xf32>, vector<64x128xf32> -> vector<64x128xf32>
    %c0_7 = arith.constant 0 : index
    %c0_8 = arith.constant 0 : index
    %19 = vector.load %arg5[%c0_7, %c0_8] : memref<64x1xf32, #tpu.memory_space<vmem>>, vector<64x1xf32>
    %20 = vector.broadcast %19 : vector<64x1xf32> to vector<64x128xf32>
    %21 = arith.addf %18, %20 : vector<64x128xf32>
    %22 = math.tanh %21 : vector<64x128xf32>
    %c0_9 = arith.constant 0 : index
    %c0_10 = arith.constant 0 : index
    %23 = vector.load %arg6[%c0_9, %c0_10] : memref<64x1xf32, #tpu.memory_space<vmem>>, vector<64x1xf32>
    %24 = vector.broadcast %23 : vector<64x1xf32> to vector<64x128xf32>
    %25 = arith.mulf %24, %22 : vector<64x128xf32>
    %cst_11 = arith.constant dense<0.000000e+00> : vector<128xf32>
    %26 = vector.multi_reduction <add>, %25, %cst_11 [0] : vector<64x128xf32> to vector<128xf32>
    %27 = vector.shape_cast %26 : vector<128xf32> to vector<1x128xf32>
    %c0_12 = arith.constant 0 : index
    %28 = memref.load %arg7[%c0_12] : memref<1xf32, #tpu.memory_space<smem>>
    %29 = vector.broadcast %28 : f32 to vector<1x128xf32>
    %30 = arith.addf %27, %29 : vector<1x128xf32>
    %c0_13 = arith.constant 0 : index
    %c0_14 = arith.constant 0 : index
    %31 = vector.load %arg8[%c0_13, %c0_14] : memref<1x128xf32, #tpu.memory_space<vmem>>, vector<1x128xf32>
    tpu.vector_store %arg8[%c0_13, %c0_14], %30 {strides = array<i32>} : memref<1x128xf32, #tpu.memory_space<vmem>>, vector<1x128xf32>,
    return
  }
  func.func @transform_0(%arg0: i32) -> (i32, i32) {
    %c0_i32 = arith.constant 0 : i32
    %c0_i32_0 = arith.constant 0 : i32
    return %c0_i32, %arg0 : i32, i32
  }
  func.func @transform_1(%arg0: i32) -> (i32, i32) {
    %c0_i32 = arith.constant 0 : i32
    %c0_i32_0 = arith.constant 0 : i32
    %c0_i32_1 = arith.constant 0 : i32
    return %c0_i32, %c0_i32_0 : i32, i32
  }
  func.func @transform_2(%arg0: i32) -> (i32, i32) {
    %c0_i32 = arith.constant 0 : i32
    %c0_i32_0 = arith.constant 0 : i32
    %c0_i32_1 = arith.constant 0 : i32
    return %c0_i32, %c0_i32_0 : i32, i32
  }
  func.func @transform_3(%arg0: i32) -> (i32, i32) {
    %c0_i32 = arith.constant 0 : i32
    %c0_i32_0 = arith.constant 0 : i32
    %c0_i32_1 = arith.constant 0 : i32
    return %c0_i32, %c0_i32_0 : i32, i32
  }
  func.func @transform_4(%arg0: i32) -> (i32, i32) {
    %c0_i32 = arith.constant 0 : i32
    %c0_i32_0 = arith.constant 0 : i32
    %c0_i32_1 = arith.constant 0 : i32
    return %c0_i32, %c0_i32_0 : i32, i32
  }
  func.func @transform_5(%arg0: i32) -> (i32, i32) {
    %c0_i32 = arith.constant 0 : i32
    %c0_i32_0 = arith.constant 0 : i32
    %c0_i32_1 = arith.constant 0 : i32
    return %c0_i32, %c0_i32_0 : i32, i32
  }
  func.func @transform_6(%arg0: i32) -> i32 {
    %c0_i32 = arith.constant 0 : i32
    %c0_i32_0 = arith.constant 0 : i32
    return %c0_i32 : i32
  }
  func.func @transform_7(%arg0: i32) -> (i32, i32) {
    %c0_i32 = arith.constant 0 : i32
    %c0_i32_0 = arith.constant 0 : i32
    return %c0_i32, %arg0 : i32, i32
  }
}

</mosaic_0001>

<llo_original>
// kernel: tpu_custom_call.1
$region0: #{tpu_custom_call.1}
  #allocation0 [shape = 'u32[]', space=smem, size = 0x4, offset = 0x4, fixed_abs, tag = 'smem constant byte address 0x4 - core index']
  #allocation1 [shape = 'u32[144,128]{1,0:T(1,128)}', space=vmem, size = 0x12000, scoped, tag = 'internal scratch']
  #allocation2 [shape = 'f32[1]{0:T(128)S(6)}', space=smem, size = 0x200, scoped, tag = 'scoped memory for tpu_custom_call.1']
  %s0 = inlined_call_operand.vmem [shape: f32[2,128], index: 0, kind: input, shape index: {}]
  %s1 = inlined_call_operand.vmem [shape: f32[128,2], index: 1, kind: input, shape index: {}]
  %s2 = inlined_call_operand.vmem [shape: f32[128,1], index: 2, kind: input, shape index: {}]
  %s3 = inlined_call_operand.vmem [shape: f32[64,128], index: 3, kind: input, shape index: {}]
  %s4 = inlined_call_operand.vmem [shape: f32[64,1], index: 4, kind: input, shape index: {}]
  %s5 = inlined_call_operand.vmem [shape: f32[64,1], index: 5, kind: input, shape index: {}]
  %s6 = inlined_call_operand.<no memory space> [shape: f32[1], index: 6, kind: input, shape index: {}]
  %s7 = inlined_call_operand.hbm [shape: f32[1,128], index: 7, kind: output, shape index: {}]
  %s8 = sld [smem:[#allocation0]]
  $region38: #{tpu_custom_call.1} parent=0
    _
  %s10 = ssub.s32 1, %s8
  %s11 = scalar_select 0, %s10, %s8
  %12 = sst [smem:[#allocation2]] %s6
  $region1: #{tpu_custom_call.1} parent=0
    #allocation3 [shape = 'u8[512]{0}', space=vmem, size = 0x400, scoped, tag = 'output window, operand 0, single buffered']
    #allocation4 [shape = 's32[1]{0}', space=sflag, size = 0x4, scoped, tag = 'scoped memory for tpu_custom_call.1']
    %13 = vsyncpa [#allocation4], 0
    // Predicated region
    $region2: #{tpu_custom_call.1} parent=1 // pred_check
      _
    $region3: #{tpu_custom_call.1} parent=1 // pred_check_branch
      %15 = sbr.rel (0) target = $region5
    $region4: #{tpu_custom_call.1} parent=1 // pred_region
      _
    $region5: #{tpu_custom_call.1} parent=1 // pred_fallthru
      _
    // Predicated region
    $region6: #{tpu_custom_call.1} parent=1 // pred_check
      _
    $region7: #{tpu_custom_call.1} parent=1 // pred_check_branch
      %17 = sbr.rel (0) target = $region9
    $region8: #{tpu_custom_call.1} parent=1 // pred_region
      _
    $region9: #{tpu_custom_call.1} parent=1 // pred_fallthru
      _
    // Predicated region
    $region10: #{tpu_custom_call.1} parent=1 // pred_check
      _
    $region11: #{tpu_custom_call.1} parent=1 // pred_check_branch
      %19 = sbr.rel (0) target = $region13
    $region12: #{tpu_custom_call.1} parent=1 // pred_region
      _
    $region13: #{tpu_custom_call.1} parent=1 // pred_fallthru
      _
    // Predicated region
    $region14: #{tpu_custom_call.1} parent=1 // pred_check
      _
    $region15: #{tpu_custom_call.1} parent=1 // pred_check_branch
      %21 = sbr.rel (0) target = $region17
    $region16: #{tpu_custom_call.1} parent=1 // pred_region
      _
    $region17: #{tpu_custom_call.1} parent=1 // pred_fallthru
      _
    // Predicated region
    $region18: #{tpu_custom_call.1} parent=1 // pred_check
      _
    $region19: #{tpu_custom_call.1} parent=1 // pred_check_branch
      %23 = sbr.rel (0) target = $region21
    $region20: #{tpu_custom_call.1} parent=1 // pred_region
      _
    $region21: #{tpu_custom_call.1} parent=1 // pred_fallthru
      _
    // Predicated region
    $region22: #{tpu_custom_call.1} parent=1 // pred_check
      _
    $region23: #{tpu_custom_call.1} parent=1 // pred_check_branch
      %25 = sbr.rel (0) target = $region25
    $region24: #{tpu_custom_call.1} parent=1 // pred_region
      _
    $region25: #{tpu_custom_call.1} parent=1 // pred_fallthru
      _
    // Predicated region
    $region26: #{tpu_custom_call.1} parent=1 // pred_check
      _
    $region27: #{tpu_custom_call.1} parent=1 // pred_check_branch
      %27 = sbr.rel (0) target = $region29
    $region28: #{tpu_custom_call.1} parent=1 // pred_region
      _
    $region29: #{tpu_custom_call.1} parent=1 // pred_fallthru
      _
    %v28 = vld [vmem:[%s0] sm:$0x3]
    %v29 = vld [vmem:[%s1] sm:$0xff]
    %v30 = vld [vmem:[%s1 + $0x8] sm:$0xff]
    %v31 = vld [vmem:[%s1 + $0x10] sm:$0xff]
    %v32 = vld [vmem:[%s1 + $0x18] sm:$0xff]
    %v33 = vld [vmem:[%s1 + $0x20] sm:$0xff]
    %v34 = vld [vmem:[%s1 + $0x28] sm:$0xff]
    %v35 = vld [vmem:[%s1 + $0x30] sm:$0xff]
    %v36 = vld [vmem:[%s1 + $0x38] sm:$0xff]
    %v37 = vld [vmem:[%s1 + $0x40] sm:$0xff]
    %v38 = vld [vmem:[%s1 + $0x48] sm:$0xff]
    %v39 = vld [vmem:[%s1 + $0x50] sm:$0xff]
    %v40 = vld [vmem:[%s1 + $0x58] sm:$0xff]
    %v41 = vld [vmem:[%s1 + $0x60] sm:$0xff]
    %v42 = vld [vmem:[%s1 + $0x68] sm:$0xff]
    %v43 = vld [vmem:[%s1 + $0x70] sm:$0xff]
    %v44 = vld [vmem:[%s1 + $0x78] sm:$0xff]
    %46 = vset.pattern.permute.xlu0 0
    %47 = vperm.xlu0 %46, %v29
    %v48 = vpop.permute.xlu0 %47
    %51 = vset.pattern.permute.xlu0 0
    %52 = vperm.xlu0 %51, %v30
    %v53 = vpop.permute.xlu0 %52
    %56 = vset.pattern.permute.xlu0 0
    %57 = vperm.xlu0 %56, %v31
    %v58 = vpop.permute.xlu0 %57
    %61 = vset.pattern.permute.xlu0 0
    %62 = vperm.xlu0 %61, %v32
    %v63 = vpop.permute.xlu0 %62
    %66 = vset.pattern.permute.xlu0 0
    %67 = vperm.xlu0 %66, %v33
    %v68 = vpop.permute.xlu0 %67
    %71 = vset.pattern.permute.xlu0 0
    %72 = vperm.xlu0 %71, %v34
    %v73 = vpop.permute.xlu0 %72
    %76 = vset.pattern.permute.xlu0 0
    %77 = vperm.xlu0 %76, %v35
    %v78 = vpop.permute.xlu0 %77
    %81 = vset.pattern.permute.xlu0 0
    %82 = vperm.xlu0 %81, %v36
    %v83 = vpop.permute.xlu0 %82
    %86 = vset.pattern.permute.xlu0 0
    %87 = vperm.xlu0 %86, %v37
    %v88 = vpop.permute.xlu0 %87
    %91 = vset.pattern.permute.xlu0 0
    %92 = vperm.xlu0 %91, %v38
    %v93 = vpop.permute.xlu0 %92
    %96 = vset.pattern.permute.xlu0 0
    %97 = vperm.xlu0 %96, %v39
    %v98 = vpop.permute.xlu0 %97
    %101 = vset.pattern.permute.xlu0 0
    %102 = vperm.xlu0 %101, %v40
    %v103 = vpop.permute.xlu0 %102
    %106 = vset.pattern.permute.xlu0 0
    %107 = vperm.xlu0 %106, %v41
    %v108 = vpop.permute.xlu0 %107
    %111 = vset.pattern.permute.xlu0 0
    %112 = vperm.xlu0 %111, %v42
    %v113 = vpop.permute.xlu0 %112
    %116 = vset.pattern.permute.xlu0 0
    %117 = vperm.xlu0 %116, %v43
    %v118 = vpop.permute.xlu0 %117
    %121 = vset.pattern.permute.xlu0 0
    %122 = vperm.xlu0 %121, %v44
    %v123 = vpop.permute.xlu0 %122
    %v125 = vlaneseq
    %v126 = vshrl.u32 %v125, 7
    %v127 = vsub.s32 0, %v126
    %v128 = vrot.slane %v28, %v127
    %v129 = vmul.f32 %v48, %v128
    %v130 = vmul.f32 %v53, %v128
    %v131 = vmul.f32 %v58, %v128
    %v132 = vmul.f32 %v63, %v128
    %v133 = vmul.f32 %v68, %v128
    %v134 = vmul.f32 %v73, %v128
    %v135 = vmul.f32 %v78, %v128
    %v136 = vmul.f32 %v83, %v128
    %v137 = vmul.f32 %v88, %v128
    %v138 = vmul.f32 %v93, %v128
    %v139 = vmul.f32 %v98, %v128
    %v140 = vmul.f32 %v103, %v128
    %v141 = vmul.f32 %v108, %v128
    %v142 = vmul.f32 %v113, %v128
    %v143 = vmul.f32 %v118, %v128
    %v144 = vmul.f32 %v123, %v128
    %145 = vset.pattern.permute.xlu0 1
    %146 = vperm.xlu0 %145, %v29
    %v147 = vpop.permute.xlu0 %146
    %149 = vset.pattern.permute.xlu0 1
    %150 = vperm.xlu0 %149, %v30
    %v151 = vpop.permute.xlu0 %150
    %153 = vset.pattern.permute.xlu0 1
    %154 = vperm.xlu0 %153, %v31
    %v155 = vpop.permute.xlu0 %154
    %157 = vset.pattern.permute.xlu0 1
    %158 = vperm.xlu0 %157, %v32
    %v159 = vpop.permute.xlu0 %158
    %161 = vset.pattern.permute.xlu0 1
    %162 = vperm.xlu0 %161, %v33
    %v163 = vpop.permute.xlu0 %162
    %165 = vset.pattern.permute.xlu0 1
    %166 = vperm.xlu0 %165, %v34
    %v167 = vpop.permute.xlu0 %166
    %169 = vset.pattern.permute.xlu0 1
    %170 = vperm.xlu0 %169, %v35
    %v171 = vpop.permute.xlu0 %170
    %173 = vset.pattern.permute.xlu0 1
    %174 = vperm.xlu0 %173, %v36
    %v175 = vpop.permute.xlu0 %174
    %177 = vset.pattern.permute.xlu0 1
    %178 = vperm.xlu0 %177, %v37
    %v179 = vpop.permute.xlu0 %178
    %181 = vset.pattern.permute.xlu0 1
    %182 = vperm.xlu0 %181, %v38
    %v183 = vpop.permute.xlu0 %182
    %185 = vset.pattern.permute.xlu0 1
    %186 = vperm.xlu0 %185, %v39
    %v187 = vpop.permute.xlu0 %186
    %189 = vset.pattern.permute.xlu0 1
    %190 = vperm.xlu0 %189, %v40
    %v191 = vpop.permute.xlu0 %190
    %193 = vset.pattern.permute.xlu0 1
    %194 = vperm.xlu0 %193, %v41
    %v195 = vpop.permute.xlu0 %194
    %197 = vset.pattern.permute.xlu0 1
    %198 = vperm.xlu0 %197, %v42
    %v199 = vpop.permute.xlu0 %198
    %201 = vset.pattern.permute.xlu0 1
    %202 = vperm.xlu0 %201, %v43
    %v203 = vpop.permute.xlu0 %202
    %205 = vset.pattern.permute.xlu0 1
    %206 = vperm.xlu0 %205, %v44
    %v207 = vpop.permute.xlu0 %206
    %v209 = vlaneseq
    %v210 = vshrl.u32 %v209, 7
    %v211 = vsub.s32 1, %v210
    %v212 = vrot.slane %v28, %v211
    %v213 = vmul.f32 %v147, %v212
    %v214 = vmul.f32 %v151, %v212
    %v215 = vmul.f32 %v155, %v212
    %v216 = vmul.f32 %v159, %v212
    %v217 = vmul.f32 %v163, %v212
    %v218 = vmul.f32 %v167, %v212
    %v219 = vmul.f32 %v171, %v212
    %v220 = vmul.f32 %v175, %v212
    %v221 = vmul.f32 %v179, %v212
    %v222 = vmul.f32 %v183, %v212
    %v223 = vmul.f32 %v187, %v212
    %v224 = vmul.f32 %v191, %v212
    %v225 = vmul.f32 %v195, %v212
    %v226 = vmul.f32 %v199, %v212
    %v227 = vmul.f32 %v203, %v212
    %v228 = vmul.f32 %v207, %v212
    %v229 = vadd.f32 %v129, %v213
    %v230 = vadd.f32 %v130, %v214
    %v231 = vadd.f32 %v131, %v215
    %v232 = vadd.f32 %v132, %v216
    %v233 = vadd.f32 %v133, %v217
    %v234 = vadd.f32 %v134, %v218
    %v235 = vadd.f32 %v135, %v219
    %v236 = vadd.f32 %v136, %v220
    %v237 = vadd.f32 %v137, %v221
    %v238 = vadd.f32 %v138, %v222
    %v239 = vadd.f32 %v139, %v223
    %v240 = vadd.f32 %v140, %v224
    %v241 = vadd.f32 %v141, %v225
    %v242 = vadd.f32 %v142, %v226
    %v243 = vadd.f32 %v143, %v227
    %v244 = vadd.f32 %v144, %v228
    %v245 = vld [vmem:[%s2] sm:$0xff]
    %v246 = vld [vmem:[%s2 + $0x8] sm:$0xff]
    %v247 = vld [vmem:[%s2 + $0x10] sm:$0xff]
    %v248 = vld [vmem:[%s2 + $0x18] sm:$0xff]
    %v249 = vld [vmem:[%s2 + $0x20] sm:$0xff]
    %v250 = vld [vmem:[%s2 + $0x28] sm:$0xff]
    %v251 = vld [vmem:[%s2 + $0x30] sm:$0xff]
    %v252 = vld [vmem:[%s2 + $0x38] sm:$0xff]
    %v253 = vld [vmem:[%s2 + $0x40] sm:$0xff]
    %v254 = vld [vmem:[%s2 + $0x48] sm:$0xff]
    %v255 = vld [vmem:[%s2 + $0x50] sm:$0xff]
    %v256 = vld [vmem:[%s2 + $0x58] sm:$0xff]
    %v257 = vld [vmem:[%s2 + $0x60] sm:$0xff]
    %v258 = vld [vmem:[%s2 + $0x68] sm:$0xff]
    %v259 = vld [vmem:[%s2 + $0x70] sm:$0xff]
    %v260 = vld [vmem:[%s2 + $0x78] sm:$0xff]
    %262 = vset.pattern.permute.xlu0 0
    %263 = vperm.xlu0 %262, %v245
    %v264 = vpop.permute.xlu0 %263
    %267 = vset.pattern.permute.xlu0 0
    %268 = vperm.xlu0 %267, %v246
    %v269 = vpop.permute.xlu0 %268
    %272 = vset.pattern.permute.xlu0 0
    %273 = vperm.xlu0 %272, %v247
    %v274 = vpop.permute.xlu0 %273
    %277 = vset.pattern.permute.xlu0 0
    %278 = vperm.xlu0 %277, %v248
    %v279 = vpop.permute.xlu0 %278
    %282 = vset.pattern.permute.xlu0 0
    %283 = vperm.xlu0 %282, %v249
    %v284 = vpop.permute.xlu0 %283
    %287 = vset.pattern.permute.xlu0 0
    %288 = vperm.xlu0 %287, %v250
    %v289 = vpop.permute.xlu0 %288
    %292 = vset.pattern.permute.xlu0 0
    %293 = vperm.xlu0 %292, %v251
    %v294 = vpop.permute.xlu0 %293
    %297 = vset.pattern.permute.xlu0 0
    %298 = vperm.xlu0 %297, %v252
    %v299 = vpop.permute.xlu0 %298
    %302 = vset.pattern.permute.xlu0 0
    %303 = vperm.xlu0 %302, %v253
    %v304 = vpop.permute.xlu0 %303
    %307 = vset.pattern.permute.xlu0 0
    %308 = vperm.xlu0 %307, %v254
    %v309 = vpop.permute.xlu0 %308
    %312 = vset.pattern.permute.xlu0 0
    %313 = vperm.xlu0 %312, %v255
    %v314 = vpop.permute.xlu0 %313
    %317 = vset.pattern.permute.xlu0 0
    %318 = vperm.xlu0 %317, %v256
    %v319 = vpop.permute.xlu0 %318
    %322 = vset.pattern.permute.xlu0 0
    %323 = vperm.xlu0 %322, %v257
    %v324 = vpop.permute.xlu0 %323
    %327 = vset.pattern.permute.xlu0 0
    %328 = vperm.xlu0 %327, %v258
    %v329 = vpop.permute.xlu0 %328
    %332 = vset.pattern.permute.xlu0 0
    %333 = vperm.xlu0 %332, %v259
    %v334 = vpop.permute.xlu0 %333
    %337 = vset.pattern.permute.xlu0 0
    %338 = vperm.xlu0 %337, %v260
    %v339 = vpop.permute.xlu0 %338
    %v341 = vadd.f32 %v229, %v264
    %v342 = vadd.f32 %v230, %v269
    %v343 = vadd.f32 %v231, %v274
    %v344 = vadd.f32 %v232, %v279
    %v345 = vadd.f32 %v233, %v284
    %v346 = vadd.f32 %v234, %v289
    %v347 = vadd.f32 %v235, %v294
    %v348 = vadd.f32 %v236, %v299
    %v349 = vadd.f32 %v237, %v304
    %v350 = vadd.f32 %v238, %v309
    %v351 = vadd.f32 %v239, %v314
    %v352 = vadd.f32 %v240, %v319
    %v353 = vadd.f32 %v241, %v324
    %v354 = vadd.f32 %v242, %v329
    %v355 = vadd.f32 %v243, %v334
    %v356 = vadd.f32 %v244, %v339
    %v357 = vtanh.pop %v341
    %v358 = vtanh.pop %v342
    %v359 = vtanh.pop %v343
    %v360 = vtanh.pop %v344
    %v361 = vtanh.pop %v345
    %v362 = vtanh.pop %v346
    %v363 = vtanh.pop %v347
    %v364 = vtanh.pop %v348
    %v365 = vtanh.pop %v349
    %v366 = vtanh.pop %v350
    %v367 = vtanh.pop %v351
    %v368 = vtanh.pop %v352
    %v369 = vtanh.pop %v353
    %v370 = vtanh.pop %v354
    %v371 = vtanh.pop %v355
    %v372 = vtanh.pop %v356
    %v373 = vld [vmem:[%s3] sm:$0xff]
    %v374 = vld [vmem:[%s3 + $0x8] sm:$0xff]
    %v375 = vld [vmem:[%s3 + $0x10] sm:$0xff]
    %v376 = vld [vmem:[%s3 + $0x18] sm:$0xff]
    %v377 = vld [vmem:[%s3 + $0x20] sm:$0xff]
    %v378 = vld [vmem:[%s3 + $0x28] sm:$0xff]
    %v379 = vld [vmem:[%s3 + $0x30] sm:$0xff]
    %v380 = vld [vmem:[%s3 + $0x38] sm:$0xff]
    %v381 = vld [vmem:[%s4] sm:$0xff]
    %v382 = vld [vmem:[%s4 + $0x8] sm:$0xff]
    %v383 = vld [vmem:[%s4 + $0x10] sm:$0xff]
    %v384 = vld [vmem:[%s4 + $0x18] sm:$0xff]
    %v385 = vld [vmem:[%s4 + $0x20] sm:$0xff]
    %v386 = vld [vmem:[%s4 + $0x28] sm:$0xff]
    %v387 = vld [vmem:[%s4 + $0x30] sm:$0xff]
    %v388 = vld [vmem:[%s4 + $0x38] sm:$0xff]
    %390 = vset.pattern.permute.xlu0 0
    %391 = vperm.xlu0 %390, %v381
    %v392 = vpop.permute.xlu0 %391
    %395 = vset.pattern.permute.xlu0 0
    %396 = vperm.xlu0 %395, %v382
    %v397 = vpop.permute.xlu0 %396
    %400 = vset.pattern.permute.xlu0 0
    %401 = vperm.xlu0 %400, %v383
    %v402 = vpop.permute.xlu0 %401
    %405 = vset.pattern.permute.xlu0 0
    %406 = vperm.xlu0 %405, %v384
    %v407 = vpop.permute.xlu0 %406
    %410 = vset.pattern.permute.xlu0 0
    %411 = vperm.xlu0 %410, %v385
    %v412 = vpop.permute.xlu0 %411
    %415 = vset.pattern.permute.xlu0 0
    %416 = vperm.xlu0 %415, %v386
    %v417 = vpop.permute.xlu0 %416
    %420 = vset.pattern.permute.xlu0 0
    %421 = vperm.xlu0 %420, %v387
    %v422 = vpop.permute.xlu0 %421
    %425 = vset.pattern.permute.xlu0 0
    %426 = vperm.xlu0 %425, %v388
    %v427 = vpop.permute.xlu0 %426
    %429 = vmatprep.subr.mxu0 0.0
    %430 = vmatpush1.msra.mxu0 %v372
    %431 = vmatprep.subr.mxu0 0.0
    %432 = vmatpush1.msra.mxu0 %v371
    %433 = vmatprep.subr.mxu0 0.0
    %434 = vmatpush1.msra.mxu0 %v370
    %435 = vmatprep.subr.mxu0 0.0
    %436 = vmatpush1.msra.mxu0 %v369
    %437 = vmatprep.subr.mxu0 0.0
    %438 = vmatpush1.msra.mxu0 %v368
    %439 = vmatprep.subr.mxu0 0.0
    %440 = vmatpush1.msra.mxu0 %v367
    %441 = vmatprep.subr.mxu0 0.0
    %442 = vmatpush1.msra.mxu0 %v366
    %443 = vmatprep.subr.mxu0 0.0
    %444 = vmatpush1.msra.mxu0 %v365
    %445 = vmatprep.subr.mxu0 0.0
    %446 = vmatpush1.msra.mxu0 %v364
    %447 = vmatprep.subr.mxu0 0.0
    %448 = vmatpush1.msra.mxu0 %v363
    %449 = vmatprep.subr.mxu0 0.0
    %450 = vmatpush1.msra.mxu0 %v362
    %451 = vmatprep.subr.mxu0 0.0
    %452 = vmatpush1.msra.mxu0 %v361
    %453 = vmatprep.subr.mxu0 0.0
    %454 = vmatpush1.msra.mxu0 %v360
    %455 = vmatprep.subr.mxu0 0.0
    %456 = vmatpush1.msra.mxu0 %v359
    %457 = vmatprep.subr.mxu0 0.0
    %458 = vmatpush1.msra.mxu0 %v358
    %459 = vmatprep.subr.mxu0 0.0
    %460 = vmatpush1.msra.mxu0 %v357
    %461 = vmatprep.subr.mxu0 0.0
    %462 = vmatpush2.msra.mxu0 0.0
    %463 = vmatprep.subr.mxu0 0.0
    %464 = vmatpush2.msra.mxu0 0.0
    %465 = vmatprep.subr.mxu0 0.0
    %466 = vmatpush2.msra.mxu0 0.0
    %467 = vmatprep.subr.mxu0 0.0
    %468 = vmatpush2.msra.mxu0 0.0
    %469 = vmatprep.subr.mxu0 0.0
    %470 = vmatpush2.msra.mxu0 0.0
    %471 = vmatprep.subr.mxu0 0.0
    %472 = vmatpush2.msra.mxu0 0.0
    %473 = vmatprep.subr.mxu0 0.0
    %474 = vmatpush2.msra.mxu0 0.0
    %475 = vmatprep.subr.mxu0 0.0
    %476 = vmatpush2.msra.mxu0 0.0
    %477 = vmatprep.subr.mxu0 0.0
    %478 = vmatpush2.msra.mxu0 0.0
    %479 = vmatprep.subr.mxu0 0.0
    %480 = vmatpush2.msra.mxu0 0.0
    %481 = vmatprep.subr.mxu0 0.0
    %482 = vmatpush2.msra.mxu0 0.0
    %483 = vmatprep.subr.mxu0 0.0
    %484 = vmatpush2.msra.mxu0 0.0
    %485 = vmatprep.subr.mxu0 0.0
    %486 = vmatpush2.msra.mxu0 0.0
    %487 = vmatprep.subr.mxu0 0.0
    %488 = vmatpush2.msra.mxu0 0.0
    %489 = vmatprep.subr.mxu0 0.0
    %490 = vmatpush2.msra.mxu0 0.0
    %491 = vmatprep.subr.mxu0 0.0
    %492 = vmatpush2.msra.mxu0 0.0
    %493 = vmatprep.mubr.f32.mxu0 0.0
    %494 = vmatmul.mubr.f32.gmra.mxu0 %v373
    %v495 = vpop.f32.mrf.mxu0
    %v496 = vadd.f32 %v392, %v495
    %v497 = vpop.f32.mrf.mxu0
    %498 = vmatprep.mubr.f32.mxu0 0.0
    %499 = vmatmul.mubr.f32.gmra.mxu0 %v374
    %v500 = vpop.f32.mrf.mxu0
    %v501 = vadd.f32 %v397, %v500
    %v502 = vpop.f32.mrf.mxu0
    %503 = vmatprep.mubr.f32.mxu0 0.0
    %504 = vmatmul.mubr.f32.gmra.mxu0 %v375
    %v505 = vpop.f32.mrf.mxu0
    %v506 = vadd.f32 %v402, %v505
    %v507 = vpop.f32.mrf.mxu0
    %508 = vmatprep.mubr.f32.mxu0 0.0
    %509 = vmatmul.mubr.f32.gmra.mxu0 %v376
    %v510 = vpop.f32.mrf.mxu0
    %v511 = vadd.f32 %v407, %v510
    %v512 = vpop.f32.mrf.mxu0
    %513 = vmatprep.mubr.f32.mxu0 0.0
    %514 = vmatmul.mubr.f32.gmra.mxu0 %v377
    %v515 = vpop.f32.mrf.mxu0
    %v516 = vadd.f32 %v412, %v515
    %v517 = vpop.f32.mrf.mxu0
    %518 = vmatprep.mubr.f32.mxu0 0.0
    %519 = vmatmul.mubr.f32.gmra.mxu0 %v378
    %v520 = vpop.f32.mrf.mxu0
    %v521 = vadd.f32 %v417, %v520
    %v522 = vpop.f32.mrf.mxu0
    %523 = vmatprep.mubr.f32.mxu0 0.0
    %524 = vmatmul.mubr.f32.gmra.mxu0 %v379
    %v525 = vpop.f32.mrf.mxu0
    %v526 = vadd.f32 %v422, %v525
    %v527 = vpop.f32.mrf.mxu0
    %528 = vmatprep.mubr.f32.mxu0 0.0
    %529 = vmatmul.mubr.f32.gmra.mxu0 %v380
    %v530 = vpop.f32.mrf.mxu0
    %v531 = vadd.f32 %v427, %v530
    %v532 = vpop.f32.mrf.mxu0
    %533 = vdwg.mxu0
    %v534 = vtanh.pop %v496
    %v535 = vtanh.pop %v501
    %v536 = vtanh.pop %v506
    %v537 = vtanh.pop %v511
    %v538 = vtanh.pop %v516
    %v539 = vtanh.pop %v521
    %v540 = vtanh.pop %v526
    %v541 = vtanh.pop %v531
    %v542 = vld [vmem:[%s5] sm:$0xff]
    %v543 = vld [vmem:[%s5 + $0x8] sm:$0xff]
    %v544 = vld [vmem:[%s5 + $0x10] sm:$0xff]
    %v545 = vld [vmem:[%s5 + $0x18] sm:$0xff]
    %v546 = vld [vmem:[%s5 + $0x20] sm:$0xff]
    %v547 = vld [vmem:[%s5 + $0x28] sm:$0xff]
    %v548 = vld [vmem:[%s5 + $0x30] sm:$0xff]
    %v549 = vld [vmem:[%s5 + $0x38] sm:$0xff]
    %551 = vset.pattern.permute.xlu0 0
    %552 = vperm.xlu0 %551, %v542
    %v553 = vpop.permute.xlu0 %552
    %556 = vset.pattern.permute.xlu0 0
    %557 = vperm.xlu0 %556, %v543
    %v558 = vpop.permute.xlu0 %557
    %561 = vset.pattern.permute.xlu0 0
    %562 = vperm.xlu0 %561, %v544
    %v563 = vpop.permute.xlu0 %562
    %566 = vset.pattern.permute.xlu0 0
    %567 = vperm.xlu0 %566, %v545
    %v568 = vpop.permute.xlu0 %567
    %571 = vset.pattern.permute.xlu0 0
    %572 = vperm.xlu0 %571, %v546
    %v573 = vpop.permute.xlu0 %572
    %576 = vset.pattern.permute.xlu0 0
    %577 = vperm.xlu0 %576, %v547
    %v578 = vpop.permute.xlu0 %577
    %581 = vset.pattern.permute.xlu0 0
    %582 = vperm.xlu0 %581, %v548
    %v583 = vpop.permute.xlu0 %582
    %586 = vset.pattern.permute.xlu0 0
    %587 = vperm.xlu0 %586, %v549
    %v588 = vpop.permute.xlu0 %587
    %v590 = vmul.f32 %v553, %v534
    %v591 = vmul.f32 %v558, %v535
    %v592 = vmul.f32 %v563, %v536
    %v593 = vmul.f32 %v568, %v537
    %v594 = vmul.f32 %v573, %v538
    %v595 = vmul.f32 %v578, %v539
    %v596 = vmul.f32 %v583, %v540
    %v597 = vmul.f32 %v588, %v541
    %v598 = vadd.f32 %v590, %v591
    %v599 = vadd.f32 %v598, %v592
    %v600 = vadd.f32 %v599, %v593
    %v601 = vadd.f32 %v600, %v594
    %v602 = vadd.f32 %v601, %v595
    %v603 = vadd.f32 %v602, %v596
    %v604 = vadd.f32 %v603, %v597
    %v605 = vrot.slane %v604, 4
    %v606 = vadd.f32 %v604, %v605
    %v607 = vrot.slane %v606, 2
    %v608 = vadd.f32 %v606, %v607
    %v609 = vrot.slane %v608, 1
    %v610 = vadd.f32 %v608, %v609
    %s611 = sld [smem:[#allocation2]]
    %v612 = vstv %s611
    %v613 = vadd.f32 %v610, %v612
    %614 = vst [vmem:[#allocation3] sm:$0x1] %v613
    // Predicated region
    $region30: #{tpu_custom_call.1} parent=1 // pred_check
      _
    $region31: #{tpu_custom_call.1} parent=1 // pred_check_branch
      %616 = sbr.rel (0) target = $region33
    $region32: #{tpu_custom_call.1} parent=1 // pred_region
      %s618 = ssub.s32 16, 16
      %619 = vsyncadd [#allocation4], %s618
      %s621 = sshll.u32 [#allocation3], 4
      %s622 = int_to_ptr.vmem [resolvable:$true] %s621
      %624 = dma.vmem_to_hbm [thread:$0]  %s622, 16, %s7, [#allocation4]
    $region33: #{tpu_custom_call.1} parent=1 // pred_fallthru
      _
    // Predicated region
    $region34: #{tpu_custom_call.1} parent=1 // pred_check
      _
    $region35: #{tpu_custom_call.1} parent=1 // pred_check_branch
      %626 = sbr.rel (0) target = $region37
    $region36: #{tpu_custom_call.1} parent=1 // pred_region
      %627 = dma.done [#allocation4], 16
    $region37: #{tpu_custom_call.1} parent=1 // pred_fallthru
      _
    %628 = vsyncpa [#allocation4], 1

</llo_original>
